<compile_context>
chip_gen: v7x
topology: tpu7x:2x2x1
jax: 0.10.0
libtpu: 0.0.40
codegen_flags: <defaults>
</compile_context>

<pallas_src>
import numpy as np
import jax
import jax.numpy as jnp
from jax.experimental import pallas as pl
from jax.experimental.pallas import tpu as pltpu

EOS_COEF = 0.1
TEMPERATURE = 0.07
N_BUCKET = 128      # matched-box padding bucket (static shapes across batches)
SV_BUCKET = 4       # verb-step padding bucket (static contrastive grid)
SENTINEL_V = -1e6   # padded verb slot: never matches any vo_map entry


def _l2_normalize(x, axis=-1, eps=1e-12):          # == F.normalize(p=2)
    n = jnp.sqrt(jnp.sum(x * x, axis=axis, keepdims=True))
    return x / jnp.maximum(n, eps)


def _safe_norm(diff):
    # original: diff / diff.amax()  (NaN when amax == 0); guard the degenerate case.
    m = jnp.max(diff)
    return diff / jnp.where(m != 0, m, 1.0)


# --------------------------- soft-token CE kernel ---------------------------

def _soft_token_ce_kernel(logits_ref, tsim_ref, eosw_ref, out_ref):
    """loss_labels_st hot path: log_softmax + weighted soft-token CE (one batch)."""
    x = logits_ref[0]                                           # (Q, C) f32
    m = jnp.max(x, axis=-1, keepdims=True)
    lse = m + jnp.log(jnp.sum(jnp.exp(x - m), axis=-1, keepdims=True))
    logp = x - lse                                              # log_softmax(-1)
    loss = jnp.sum(-logp * tsim_ref[0], axis=-1, keepdims=True)  # (Q, 1)
    out_ref[0] = loss * eosw_ref[0]


def soft_token_ce(logits, target_sim, eos_w):
    B, Q, C = logits.shape
    out = pl.pallas_call(
        _soft_token_ce_kernel,
        out_shape=jax.ShapeDtypeStruct((B, Q, 1), jnp.float32),
        grid=(B,),
        in_specs=[pl.BlockSpec((1, Q, C), lambda b: (b, 0, 0)),
                  pl.BlockSpec((1, Q, C), lambda b: (b, 0, 0)),
                  pl.BlockSpec((1, Q, 1), lambda b: (b, 0, 0))],
        out_specs=pl.BlockSpec((1, Q, 1), lambda b: (b, 0, 0)),
        compiler_params=pltpu.CompilerParams(
            dimension_semantics=("parallel",)),
    )(logits.astype(jnp.float32), target_sim, eos_w[..., None])
    return out[..., 0]                                          # (B, Q)


# ------------------- fused contrastive (align + verb-object) ----------------

def _contrastive_kernel(inv_t_ref, img_ref, txt_ref, pos_ref, mask_ref, tmask_ref,
                        b2t_ref, t2b_ref):
    """One grid point = one (step, batch) contrastive tile.

    bf16 MXU matmul with a pre-transposed (D, T) RHS; the bf16 positive map is
    thresholded in place (no f32 copy); one shared stabilised exp feeds both
    logsumexps (per-tile max == per-batch max of the reference; documented
    numerics delta is negligible for 1/temperature ~ 14 on cosine inputs).
    """
    inv_t = inv_t_ref[0, 0]                                     # SMEM scalar
    img = img_ref[0, 0]                                         # (Q, D) bf16
    txt = txt_ref[0, 0]                                         # (D, T) bf16
    logits = jnp.dot(img, txt, preferred_element_type=jnp.float32) * inv_t  # (Q, T)

    posb = pos_ref[0, 0] > 0                                    # (Q, T) bool (bf16 in)
    pmasked = jnp.where(posb, logits, 0.0)

    m = jnp.max(logits, axis=1, keepdims=True)
    m = jnp.max(m, axis=0, keepdims=True)                       # (1, 1)
    e = jnp.exp(logits - m)

    # box -> token (reduce over tokens, lane axis)
    npos2 = jnp.sum(posb.astype(jnp.float32), axis=1, keepdims=True)   # (Q, 1)
    lse2 = m + jnp.log(jnp.sum(e, axis=1, keepdims=True))
    b2t = -jnp.sum(pmasked, axis=1, keepdims=True) / (npos2 + 1e-6) + lse2
    b2t_ref[0, 0] = jnp.where(npos2 > 0, b2t, 0.0) * mask_ref[0, 0]

    # token -> box (reduce over queries, sublane axis)
    npos1 = jnp.sum(posb.astype(jnp.float32), axis=0, keepdims=True)   # (1, T)
    lse1 = m + jnp.log(jnp.sum(e, axis=0, keepdims=True))
    t2b = -jnp.sum(pmasked, axis=0, keepdims=True) / (npos1 + 1e-6) + lse1
    t2b_ref[0, 0] = jnp.where(npos1 > 0, t2b, 0.0) * tmask_ref[0, 0]


def contrastive_terms(img_all, txt2, pos_all, mask_all, tmask_all, inv_temp):
    """Single pallas_call; grid over (step S = 1 + Sv_pad, batch B)."""
    S, B, Q, D = img_all.shape
    T = txt2.shape[3]
    return pl.pallas_call(
        _contrastive_kernel,
        out_shape=(jax.ShapeDtypeStruct((S, B, Q, 1), jnp.float32),
                   jax.ShapeDtypeStruct((S, B, 1, T), jnp.float32)),
        grid=(S, B),
        in_specs=[pl.BlockSpec(memory_space=pltpu.MemorySpace.SMEM),   # 1/temperature
                  pl.BlockSpec((1, 1, Q, D), lambda s, b: (s, b, 0, 0)),
                  # text is 2-deep: slot 0 = proj_tokens, slot 1 = normalized o_text
                  pl.BlockSpec((1, 1, D, T),
                               lambda s, b: (jnp.minimum(s, 1), b, 0, 0)),
                  pl.BlockSpec((1, 1, Q, T), lambda s, b: (s, b, 0, 0)),
                  pl.BlockSpec((1, 1, Q, 1), lambda s, b: (s, b, 0, 0)),
                  pl.BlockSpec((1, 1, 1, T), lambda s, b: (s, b, 0, 0))],
        out_specs=(pl.BlockSpec((1, 1, Q, 1), lambda s, b: (s, b, 0, 0)),
                   pl.BlockSpec((1, 1, 1, T), lambda s, b: (s, b, 0, 0))),
        compiler_params=pltpu.CompilerParams(
            dimension_semantics=("parallel", "parallel")),
    )(inv_temp, img_all, txt2, pos_all, mask_all, tmask_all)


# ----------------------- fused, jitted device section -----------------------

@jax.jit
def _device_losses(pred_logits, pred_boxes, proj_queries, proj_tokens,
                   v_text, o_text, vo_query,
                   bi, si, pm_rows, vo_rows, tgt_boxes, box_valid,
                   inds, vo_map_bc, v_vals, inv_temp, eos_coef, num_boxes):
    B, Q, C = pred_logits.shape
    T = proj_tokens.shape[1]
    # v_vals is padded to a fixed bucket: Sv is static across batches.

    # ---------------------------- loss_labels_st ----------------------------
    # NOTE: padded (bi, si) entries duplicate the last real pair and scatter the
    # same rows -> .set is idempotent.  Keep that invariant if padding changes.
    target_sim = jnp.zeros((B, Q, C), jnp.float32).at[:, :, -1].set(1.0)
    target_sim = target_sim.at[bi, si].set(pm_rows)
    eos_w = jnp.full((B, Q), eos_coef, jnp.float32).at[bi, si].set(1.0)
    loss_bq = soft_token_ce(pred_logits, target_sim, eos_w)
    diff_ce = jnp.sum(loss_bq, axis=-1)                        # (B,)
    loss_ce = jnp.sum(loss_bq) / num_boxes
    adapt_w1 = jax.nn.sigmoid(_safe_norm(diff_ce)) + 0.5

    # --------------------- shared base maps / masks (device) ----------------
    arange_t = jnp.arange(T)
    oh_last = (arange_t[None, :] == inds[:, None]).astype(jnp.bfloat16)
    oh_prev = (arange_t[None, :] == (inds - 1)[:, None]).astype(jnp.bfloat16)
    base = jnp.broadcast_to((0.5 * (oh_last + oh_prev))[:, None, :], (B, Q, T))
    mask_bq = jnp.full((B, Q), eos_coef, jnp.float32).at[bi, si].set(1.0)
    tmask_bt = jnp.full((B, T), eos_coef, jnp.float32
                        ).at[jnp.arange(B), inds].set(1.0)

    # ----------------------- contrastive-align (step 0) ---------------------
    pos_align = base.at[bi, si].set(pm_rows[:, :T].astype(jnp.bfloat16))

    # --------------------- verb-object (steps 1..Sv_pad) --------------------
    v_mask = (vo_map_bc[None, :, :T] == v_vals[:, None, None])         # (Sv,B,T)
    v_mask_f = v_mask.astype(jnp.float32)
    has = jnp.sum(v_mask_f, -1, keepdims=True) > 0
    v_mask_ = jnp.where(has, v_mask_f, 1.0)
    denom = jnp.maximum(jnp.sum(v_mask_, -1, keepdims=True), 1.0)
    v_text_s = jnp.einsum('sbt,btd->sbd', v_mask_, v_text) / denom     # (Sv,B,D)

    def _vo_step(carry, vt):                        # compounding chain (reference)
        new = _l2_normalize(carry * vt[:, None, :])
        return new, new
    _, vo_q_stack = jax.lax.scan(_vo_step, vo_query, v_text_s)         # (Sv,B,Q,D)

    cur_pm = (vo_rows[None, :, :T] ==
              (v_vals[:, None, None] + 0.5)).astype(jnp.bfloat16)      # (Sv,Np,T)
    pos_v = jax.vmap(lambda c: base.at[bi, si].set(c))(cur_pm)         # (Sv,B,Q,T)
    row_empty = jnp.logical_not(jnp.any(pos_v > 0, axis=-1, keepdims=True))
    pos_v = jnp.where(row_empty, base[None], pos_v)

    valid = jnp.any(v_mask, -1).astype(jnp.float32)                    # (Sv,B)
    mask_v = mask_bq[None] * valid[:, :, None]
    tmask_v = tmask_bt[None] * valid[:, :, None]

    o_text_n = _l2_normalize(o_text)
    img_all = jnp.concatenate([proj_queries[None], vo_q_stack], 0
                              ).astype(jnp.bfloat16)                   # (S,B,Q,D)
    # 2-deep text operand, pre-transposed once to (B, D, T) for the MXU RHS.
    txt2 = jnp.stack([jnp.swapaxes(proj_tokens, -1, -2),
                      jnp.swapaxes(o_text_n, -1, -2)], 0).astype(jnp.bfloat16)
    pos_all = jnp.concatenate([pos_align[None], pos_v], 0)             # (S,B,Q,T) bf16
    mask_all = jnp.concatenate([mask_bq[None], mask_v], 0)[..., None]          # (S,B,Q,1)
    tmask_all = jnp.concatenate([tmask_bt[None], tmask_v], 0)[:, :, None, :]   # (S,B,1,T)

    b2t_all, t2b_all = contrastive_terms(img_all, txt2, pos_all,
                                         mask_all, tmask_all, inv_temp)
    row_b2t = jnp.sum(b2t_all, axis=(2, 3))        # (S,B)
    row_t2b = jnp.sum(t2b_all, axis=(2, 3))        # (S,B)

    # contrastive-align loss (step 0)
    diff_al = row_b2t[0] + row_t2b[0]
    tot_al = (jnp.sum(row_b2t[0] * adapt_w1) + jnp.sum(row_t2b[0] * adapt_w1)) / 2
    loss_sem_align = tot_al / num_boxes
    adapt_w2 = jax.nn.sigmoid(_safe_norm(diff_al)) + 0.5

    # verb-object loss (steps 1..; padded steps are exactly 0 via valid=0 masks)
    rb, rt = row_b2t[1:], row_t2b[1:]
    diff_vo = jnp.sum(rb + rt, axis=0)
    tot_vo = (jnp.sum(rb * adapt_w2[None]) + jnp.sum(rt * adapt_w2[None])) / 2
    loss_verb_obj = tot_vo / num_boxes
    adapt_w3 = jax.nn.sigmoid(_safe_norm(diff_vo)) + 0.5

    # ------------------------------ loss_boxes ------------------------------
    # Folded into XLA (per perf review): ~KiB of elementwise math, a standalone
    # pallas_call launch costs more than the compute.  Padded boxes carry weight 0.
    src = pred_boxes[bi, si]                                    # (Np,6) gather
    w = adapt_w3[bi] * box_valid                                # (Np,)
    l1 = jnp.sum(jnp.abs(src[:, :3] - tgt_boxes[:, :3]) +
                 0.2 * jnp.abs(src[:, 3:] - tgt_boxes[:, 3:]), axis=-1)
    ss = jnp.maximum(src[:, 3:], 1e-6)
    ts = jnp.maximum(tgt_boxes[:, 3:], 1e-6)
    a0 = src[:, :3] - 0.5 * ss
    a1 = src[:, :3] + 0.5 * ss
    b0 = tgt_boxes[:, :3] - 0.5 * ts
    b1 = tgt_boxes[:, :3] + 0.5 * ts
    inter = jnp.prod(jnp.maximum(jnp.minimum(a1, b1) - jnp.maximum(a0, b0), 0.0), -1)
    vol_a = jnp.prod(ss, -1)
    vol_b = jnp.prod(ts, -1)
    union = vol_a + vol_b - inter
    iou = inter / union
    encl = jnp.prod(jnp.maximum(jnp.maximum(a1, b1) - jnp.minimum(a0, b0), 0.0), -1)
    giou = iou - (encl - union) / encl
    loss_bbox = jnp.sum(l1 * w) / num_boxes
    loss_giou = jnp.sum((1.0 - giou) * w) / num_boxes

    return {'loss_ce': loss_ce,
            'loss_sem_align': loss_sem_align,
            'loss_verb_obj': loss_verb_obj,
            'loss_bbox': loss_bbox,
            'loss_giou': loss_giou}


# ------------------------------ host-side glue ------------------------------

class SimpleMatcher:
    """Deterministic identity matcher: target j <-> query j."""
    # TODO(synk): the real Hungarian matcher is an external module; replaced by a
    # deterministic identity assignment for this synthetic kernel.
    def __call__(self, outputs, targets):
        return [(np.arange(len(t['boxes']), dtype=np.int64),
                 np.arange(len(t['boxes']), dtype=np.int64))
                for t in targets]


class SetCriterion:
    def __init__(self, matcher, losses={}, eos_coef=0.1, temperature=0.07):
        self.matcher = matcher
        self.eos_coef = eos_coef
        self.losses = losses
        self.temperature = temperature   # runtime SMEM scalar -> no recompile

    @staticmethod
    def _get_src_permutation_idx(indices):
        batch_idx = np.concatenate(
            [np.full_like(src, i) for i, (src, _) in enumerate(indices)])
        src_idx = np.concatenate([src for src, _ in indices])
        return batch_idx, src_idx

    def forward(self, outputs, targets):
        indices = self.matcher(outputs, targets)
        num_boxes = sum(len(inds[1]) for inds in indices)
        B, Q, C = outputs['pred_logits'].shape
        T = outputs['proj_tokens'].shape[1]
        # TODO(synk): the fused contrastive kernel assumes v_text/o_text share the
        # token length of proj_tokens; otherwise split into two pallas_calls.
        assert outputs['v_text'].shape[1] == T and outputs['o_text'].shape[1] == T

        batch_idx, src_idx = self._get_src_permutation_idx(indices)
        # matched rows (same row ordering serves CE, align and verb-object)
        pm_rows = np.concatenate([np.asarray(t['positive_map'])[i]
                                  for t, (_, i) in zip(targets, indices)], 0
                                 ).astype(np.float32)
        vo_rows = np.concatenate([np.asarray(t['target_vo_map'])[i]
                                  for t, (_, i) in zip(targets, indices)], 0
                                 ).astype(np.float32)
        box_rows = np.concatenate([np.asarray(t['boxes'])[i]
                                   for t, (_, i) in zip(targets, indices)], 0
                                  ).astype(np.float32)

        # pad matched entries to a fixed bucket so every device shape is static
        # (padded entries duplicate the last real entry -> idempotent scatters,
        #  and carry zero weight in the box loss).
        M = len(src_idx)
        n_pad_total = max(N_BUCKET, int(-(-M // N_BUCKET)) * N_BUCKET)
        pad = n_pad_total - M

        def pad_idx(a):
            return np.concatenate([a, np.full((pad,), a[-1], a.dtype)])

        def pad_rows(a):
            return np.concatenate([a, np.repeat(a[-1:], pad, axis=0)], 0)

        bi = pad_idx(batch_idx.astype(np.int32))
        si = pad_idx(src_idx.astype(np.int32))
        pm_rows_p = pad_rows(pm_rows)
        vo_rows_p = pad_rows(vo_rows)
        dummy_box = np.array([[0.5, 0.5, 0.5, 0.1, 0.1, 0.1]], np.float32)
        box_rows_p = np.concatenate([box_rows, np.repeat(dummy_box, pad, 0)], 0)
        box_valid = np.concatenate([np.ones((M,), np.float32),
                                    np.zeros((pad,), np.float32)])

        att = np.asarray(outputs['tokenized']['attention_mask'])
        inds = (att.sum(1) - 1).astype(np.int32)
        vo_map_bc = np.stack([np.asarray(t['target_vo_map'])[0] for t in targets], 0
                             ).astype(np.float32)
        max_num_vo = int(vo_rows.max() - 0.5)
        active_v = [float(v) for v in range(0, max_num_vo + 1)
                    if (vo_map_bc[:, :T] == v).sum() > 0]
        n_act = len(active_v)
        # pad the verb-step count to a fixed bucket -> static pallas grid / jit
        sv_pad = SV_BUCKET * max(1, int(-(-n_act // SV_BUCKET)))
        v_vals = np.full((sv_pad,), SENTINEL_V, np.float32)
        v_vals[:n_act] = active_v

        losses = _device_losses(
            outputs['pred_logits'].astype(jnp.float32), outputs['pred_boxes'],
            outputs['proj_queries'], outputs['proj_tokens'],
            outputs['v_text'], outputs['o_text'], outputs['vo_query'],
            jnp.asarray(bi), jnp.asarray(si), jnp.asarray(pm_rows_p),
            jnp.asarray(vo_rows_p), jnp.asarray(box_rows_p), jnp.asarray(box_valid),
            jnp.asarray(inds), jnp.asarray(vo_map_bc), jnp.asarray(v_vals),
            jnp.full((1, 1), 1.0 / self.temperature, jnp.float32),
            jnp.float32(self.eos_coef), jnp.float32(num_boxes))
        return losses, indices


# --------------------------------- main ------------------------------------

if __name__ == "__main__":
    B, Q, C, T, D = 2, 8, 32, 16, 32
    key = jax.random.PRNGKey(0)
    ks = jax.random.split(key, 12)

    pred_logits = jax.random.normal(ks[0], (B, Q, C), jnp.float32)
    centers = jax.random.uniform(ks[1], (B, Q, 3), minval=0.2, maxval=0.8)
    sizes = jax.random.uniform(ks[2], (B, Q, 3), minval=0.05, maxval=0.3)
    pred_boxes = jnp.concatenate([centers, sizes], axis=-1)
    proj_queries = _l2_normalize(jax.random.normal(ks[3], (B, Q, D), jnp.float32))
    proj_tokens = _l2_normalize(jax.random.normal(ks[4], (B, T, D), jnp.float32))
    v_text = jax.random.normal(ks[5], (B, T, D), jnp.float32)
    o_text = jax.random.normal(ks[6], (B, T, D), jnp.float32)
    vo_query = jax.random.normal(ks[7], (B, Q, D), jnp.float32)

    attention_mask = np.zeros((B, T), np.int32)
    attention_mask[0, :10] = 1
    attention_mask[1, :12] = 1

    outputs = {
        'pred_logits': pred_logits,
        'pred_boxes': pred_boxes,
        'proj_queries': proj_queries,
        'proj_tokens': proj_tokens,
        'v_text': v_text,
        'o_text': o_text,
        'vo_query': vo_query,
        'tokenized': {'attention_mask': attention_mask},
    }

    def make_boxes(k, n):
        kc, ks_ = jax.random.split(k)
        c = jax.random.uniform(kc, (n, 3), minval=0.2, maxval=0.8)
        s = jax.random.uniform(ks_, (n, 3), minval=0.05, maxval=0.3)
        return np.asarray(jnp.concatenate([c, s], -1), np.float32)

    n0, n1 = 3, 2
    pm0 = np.zeros((n0, C), np.float32)
    for j in range(n0):
        pm0[j, 2 * j] = 0.5
        pm0[j, 2 * j + 1] = 0.5
    pm1 = np.zeros((n1, C), np.float32)
    for j in range(n1):
        pm1[j, 2 * j] = 0.5
        pm1[j, 2 * j + 1] = 0.5

    vo0 = np.full((n0, C), -1.0, np.float32)
    vo0[0, 1] = 0.0; vo0[0, 2] = 0.0; vo0[0, 3] = 0.5
    vo0[1, 4] = 1.0; vo0[1, 5] = 1.5
    vo0[2, 1] = 0.0; vo0[2, 6] = 0.5
    vo1 = np.full((n1, C), -1.0, np.float32)
    vo1[0, 2] = 0.0; vo1[0, 3] = 0.5; vo1[0, 7] = 1.0; vo1[0, 8] = 1.5
    vo1[1, 2] = 0.0; vo1[1, 9] = 0.5

    targets = [
        {'boxes': make_boxes(ks[8], n0), 'positive_map': pm0, 'target_vo_map': vo0},
        {'boxes': make_boxes(ks[9], n1), 'positive_map': pm1, 'target_vo_map': vo1},
    ]

    criterion = SetCriterion(SimpleMatcher(), losses={},
                             eos_coef=EOS_COEF, temperature=TEMPERATURE)
    losses, indices = criterion.forward(outputs, targets)
    losses = {k: jax.block_until_ready(v) for k, v in losses.items()}
    for v in losses.values():
        assert np.isfinite(np.asarray(v)).all()
    print("KERNEL_OK")
</pallas_src>

<mosaic_0001>
module attributes {stable_mosaic.version = 11 : i64} {
  func.func @_contrastive_kernel(%arg0: i32, %arg1: i32, %arg2: memref<1x1xf32, #tpu.memory_space<smem>>, %arg3: memref<1x1x8x32xbf16, #tpu.memory_space<vmem>>, %arg4: memref<1x1x32x16xbf16, #tpu.memory_space<vmem>>, %arg5: memref<1x1x8x16xbf16, #tpu.memory_space<vmem>>, %arg6: memref<1x1x8x1xf32, #tpu.memory_space<vmem>>, %arg7: memref<1x1x1x16xf32, #tpu.memory_space<vmem>>, %arg8: memref<1x1x8x1xf32, #tpu.memory_space<vmem>>, %arg9: memref<1x1x1x16xf32, #tpu.memory_space<vmem>>) attributes {dimension_semantics = [#tpu.dimension_semantics<parallel>, #tpu.dimension_semantics<parallel>], iteration_bounds = array<i64: 5, 2>, scalar_prefetch = 0 : i64, scratch_operands = 0 : i64, tpu.core_type = #tpu.core_type<tc>, window_params = [{transform_indices = @transform_0, window_bounds = array<i64: 1, 1>}, {transform_indices = @transform_1, window_bounds = array<i64: 1, 1, 8, 32>}, {transform_indices = @transform_2, window_bounds = array<i64: 1, 1, 32, 16>}, {transform_indices = @transform_3, window_bounds = array<i64: 1, 1, 8, 16>}, {transform_indices = @transform_4, window_bounds = array<i64: 1, 1, 8, 1>}, {transform_indices = @transform_5, window_bounds = array<i64: 1, 1, 1, 16>}, {transform_indices = @transform_6, window_bounds = array<i64: 1, 1, 8, 1>}, {transform_indices = @transform_7, window_bounds = array<i64: 1, 1, 1, 16>}]} {
    %c0 = arith.constant 0 : index
    %c0_0 = arith.constant 0 : index
    %0 = memref.load %arg2[%c0, %c0_0] : memref<1x1xf32, #tpu.memory_space<smem>>
    %c0_1 = arith.constant 0 : index
    %c0_2 = arith.constant 0 : index
    %c0_3 = arith.constant 0 : index
    %c0_4 = arith.constant 0 : index
    %1 = vector.load %arg3[%c0_1, %c0_2, %c0_3, %c0_4] : memref<1x1x8x32xbf16, #tpu.memory_space<vmem>>, vector<1x1x8x32xbf16>
    %2 = vector.shape_cast %1 : vector<1x1x8x32xbf16> to vector<8x32xbf16>
    %c0_5 = arith.constant 0 : index
    %c0_6 = arith.constant 0 : index
    %c0_7 = arith.constant 0 : index
    %c0_8 = arith.constant 0 : index
    %3 = vector.load %arg4[%c0_5, %c0_6, %c0_7, %c0_8] : memref<1x1x32x16xbf16, #tpu.memory_space<vmem>>, vector<1x1x32x16xbf16>
    %4 = vector.shape_cast %3 : vector<1x1x32x16xbf16> to vector<32x16xbf16>
    %cst = arith.constant dense<0.000000e+00> : vector<8x16xf32>
    %5 = tpu.matmul %2, %4, %cst {dimension_numbers = #tpu.dot_dimension_numbers<[1], [0], [0], [1], [0, 0, 1, 1], [], []>} : vector<8x32xbf16>, vector<32x16xbf16>, vector<8x16xf32> -> vector<8x16xf32>
    %6 = vector.broadcast %0 : f32 to vector<8x16xf32>
    %7 = arith.mulf %5, %6 : vector<8x16xf32>
    %c0_9 = arith.constant 0 : index
    %c0_10 = arith.constant 0 : index
    %c0_11 = arith.constant 0 : index
    %c0_12 = arith.constant 0 : index
    %8 = vector.load %arg5[%c0_9, %c0_10, %c0_11, %c0_12] : memref<1x1x8x16xbf16, #tpu.memory_space<vmem>>, vector<1x1x8x16xbf16>
    %9 = vector.shape_cast %8 : vector<1x1x8x16xbf16> to vector<8x16xbf16>
    %cst_13 = arith.constant 0.000000e+00 : bf16
    %10 = vector.broadcast %cst_13 : bf16 to vector<8x16xbf16>
    %11 = arith.cmpf ogt, %9, %10 : vector<8x16xbf16>
    %cst_14 = arith.constant 0.000000e+00 : f32
    %12 = vector.broadcast %cst_14 : f32 to vector<8x16xf32>
    %13 = arith.select %11, %7, %12 : vector<8x16xi1>, vector<8x16xf32>
    %cst_15 = arith.constant dense<0xFF800000> : vector<8xf32>
    %14 = vector.multi_reduction <maximumf>, %7, %cst_15 [1] : vector<8x16xf32> to vector<8xf32>
    %15 = vector.shape_cast %14 : vector<8xf32> to vector<8x1xf32>
    %cst_16 = arith.constant dense<0xFF800000> : vector<1xf32>
    %16 = vector.multi_reduction <maximumf>, %15, %cst_16 [0] : vector<8x1xf32> to vector<1xf32>
    %17 = vector.shape_cast %16 : vector<1xf32> to vector<1x1xf32>
    %18 = vector.broadcast %17 : vector<1x1xf32> to vector<8x16xf32>
    %19 = arith.subf %7, %18 : vector<8x16xf32>
    %20 = math.exp %19 : vector<8x16xf32>
    %21 = arith.extui %11 : vector<8x16xi1> to vector<8x16xi32>
    %22 = arith.sitofp %21 : vector<8x16xi32> to vector<8x16xf32>
    %cst_17 = arith.constant dense<0.000000e+00> : vector<8xf32>
    %23 = vector.multi_reduction <add>, %22, %cst_17 [1] : vector<8x16xf32> to vector<8xf32>
    %24 = vector.shape_cast %23 : vector<8xf32> to vector<8x1xf32>
    %cst_18 = arith.constant dense<0.000000e+00> : vector<8xf32>
    %25 = vector.multi_reduction <add>, %20, %cst_18 [1] : vector<8x16xf32> to vector<8xf32>
    %26 = vector.shape_cast %25 : vector<8xf32> to vector<8x1xf32>
    %27 = math.log %26 : vector<8x1xf32>
    %28 = vector.broadcast %17 : vector<1x1xf32> to vector<8x1xf32>
    %29 = arith.addf %28, %27 : vector<8x1xf32>
    %cst_19 = arith.constant dense<0.000000e+00> : vector<8xf32>
    %30 = vector.multi_reduction <add>, %13, %cst_19 [1] : vector<8x16xf32> to vector<8xf32>
    %31 = vector.shape_cast %30 : vector<8xf32> to vector<8x1xf32>
    %cst_20 = arith.constant 0.000000e+00 : f32
    %32 = vector.broadcast %cst_20 : f32 to vector<8x1xf32>
    %33 = arith.subf %32, %31 : vector<8x1xf32>
    %cst_21 = arith.constant 9.99999997E-7 : f32
    %34 = vector.broadcast %cst_21 : f32 to vector<8x1xf32>
    %35 = arith.addf %24, %34 : vector<8x1xf32>
    %36 = arith.divf %33, %35 : vector<8x1xf32>
    %37 = arith.addf %36, %29 : vector<8x1xf32>
    %cst_22 = arith.constant 0.000000e+00 : f32
    %38 = vector.broadcast %cst_22 : f32 to vector<8x1xf32>
    %39 = arith.cmpf ogt, %24, %38 : vector<8x1xf32>
    %cst_23 = arith.constant 0.000000e+00 : f32
    %40 = vector.broadcast %cst_23 : f32 to vector<8x1xf32>
    %41 = arith.select %39, %37, %40 : vector<8x1xi1>, vector<8x1xf32>
    %c0_24 = arith.constant 0 : index
    %c0_25 = arith.constant 0 : index
    %c0_26 = arith.constant 0 : index
    %c0_27 = arith.constant 0 : index
    %42 = vector.load %arg6[%c0_24, %c0_25, %c0_26, %c0_27] : memref<1x1x8x1xf32, #tpu.memory_space<vmem>>, vector<1x1x8x1xf32>
    %43 = vector.shape_cast %42 : vector<1x1x8x1xf32> to vector<8x1xf32>
    %44 = arith.mulf %41, %43 : vector<8x1xf32>
    %c0_28 = arith.constant 0 : index
    %c0_29 = arith.constant 0 : index
    %c0_30 = arith.constant 0 : index
    %c0_31 = arith.constant 0 : index
    %45 = vector.load %arg8[%c0_28, %c0_29, %c0_30, %c0_31] : memref<1x1x8x1xf32, #tpu.memory_space<vmem>>, vector<1x1x8x1xf32>
    %46 = vector.shape_cast %45 : vector<1x1x8x1xf32> to vector<8x1xf32>
    %47 = vector.shape_cast %44 : vector<8x1xf32> to vector<1x1x8x1xf32>
    tpu.vector_store %arg8[%c0_28, %c0_29, %c0_30, %c0_31], %47 {strides = array<i32>} : memref<1x1x8x1xf32, #tpu.memory_space<vmem>>, vector<1x1x8x1xf32>,
    %48 = arith.extui %11 : vector<8x16xi1> to vector<8x16xi32>
    %49 = arith.sitofp %48 : vector<8x16xi32> to vector<8x16xf32>
    %cst_32 = arith.constant dense<0.000000e+00> : vector<16xf32>
    %50 = vector.multi_reduction <add>, %49, %cst_32 [0] : vector<8x16xf32> to vector<16xf32>
    %51 = vector.shape_cast %50 : vector<16xf32> to vector<1x16xf32>
    %cst_33 = arith.constant dense<0.000000e+00> : vector<16xf32>
    %52 = vector.multi_reduction <add>, %20, %cst_33 [0] : vector<8x16xf32> to vector<16xf32>
    %53 = vector.shape_cast %52 : vector<16xf32> to vector<1x16xf32>
    %54 = math.log %53 : vector<1x16xf32>
    %55 = vector.broadcast %17 : vector<1x1xf32> to vector<1x16xf32>
    %56 = arith.addf %55, %54 : vector<1x16xf32>
    %cst_34 = arith.constant dense<0.000000e+00> : vector<16xf32>
    %57 = vector.multi_reduction <add>, %13, %cst_34 [0] : vector<8x16xf32> to vector<16xf32>
    %58 = vector.shape_cast %57 : vector<16xf32> to vector<1x16xf32>
    %cst_35 = arith.constant 0.000000e+00 : f32
    %59 = vector.broadcast %cst_35 : f32 to vector<1x16xf32>
    %60 = arith.subf %59, %58 : vector<1x16xf32>
    %cst_36 = arith.constant 9.99999997E-7 : f32
    %61 = vector.broadcast %cst_36 : f32 to vector<1x16xf32>
    %62 = arith.addf %51, %61 : vector<1x16xf32>
    %63 = arith.divf %60, %62 : vector<1x16xf32>
    %64 = arith.addf %63, %56 : vector<1x16xf32>
    %cst_37 = arith.constant 0.000000e+00 : f32
    %65 = vector.broadcast %cst_37 : f32 to vector<1x16xf32>
    %66 = arith.cmpf ogt, %51, %65 : vector<1x16xf32>
    %cst_38 = arith.constant 0.000000e+00 : f32
    %67 = vector.broadcast %cst_38 : f32 to vector<1x16xf32>
    %68 = arith.select %66, %64, %67 : vector<1x16xi1>, vector<1x16xf32>
    %c0_39 = arith.constant 0 : index
    %c0_40 = arith.constant 0 : index
    %c0_41 = arith.constant 0 : index
    %c0_42 = arith.constant 0 : index
    %69 = vector.load %arg7[%c0_39, %c0_40, %c0_41, %c0_42] : memref<1x1x1x16xf32, #tpu.memory_space<vmem>>, vector<1x1x1x16xf32>
    %70 = vector.shape_cast %69 : vector<1x1x1x16xf32> to vector<1x16xf32>
    %71 = arith.mulf %68, %70 : vector<1x16xf32>
    %c0_43 = arith.constant 0 : index
    %c0_44 = arith.constant 0 : index
    %c0_45 = arith.constant 0 : index
    %c0_46 = arith.constant 0 : index
    %72 = vector.load %arg9[%c0_43, %c0_44, %c0_45, %c0_46] : memref<1x1x1x16xf32, #tpu.memory_space<vmem>>, vector<1x1x1x16xf32>
    %73 = vector.shape_cast %72 : vector<1x1x1x16xf32> to vector<1x16xf32>
    %74 = vector.shape_cast %71 : vector<1x16xf32> to vector<1x1x1x16xf32>
    tpu.vector_store %arg9[%c0_43, %c0_44, %c0_45, %c0_46], %74 {strides = array<i32>} : memref<1x1x1x16xf32, #tpu.memory_space<vmem>>, vector<1x1x1x16xf32>,
    return
  }
  func.func @transform_0(%arg0: i32, %arg1: i32) -> (i32, i32) {
    %c0_i32 = arith.constant 0 : i32
    %c0_i32_0 = arith.constant 0 : i32
    %c0_i32_1 = arith.constant 0 : i32
    return %c0_i32, %c0_i32_0 : i32, i32
  }
  func.func @transform_1(%arg0: i32, %arg1: i32) -> (i32, i32, i32, i32) {
    %c0_i32 = arith.constant 0 : i32
    %c0_i32_0 = arith.constant 0 : i32
    %c0_i32_1 = arith.constant 0 : i32
    return %arg0, %arg1, %c0_i32, %c0_i32_0 : i32, i32, i32, i32
  }
  func.func @transform_2(%arg0: i32, %arg1: i32) -> (i32, i32, i32, i32) {
    %c1_i32 = arith.constant 1 : i32
    %0 = arith.minsi %arg0, %c1_i32 : i32
    %c0_i32 = arith.constant 0 : i32
    %c0_i32_0 = arith.constant 0 : i32
    %c0_i32_1 = arith.constant 0 : i32
    return %0, %arg1, %c0_i32, %c0_i32_0 : i32, i32, i32, i32
  }
  func.func @transform_3(%arg0: i32, %arg1: i32) -> (i32, i32, i32, i32) {
    %c0_i32 = arith.constant 0 : i32
    %c0_i32_0 = arith.constant 0 : i32
    %c0_i32_1 = arith.constant 0 : i32
    return %arg0, %arg1, %c0_i32, %c0_i32_0 : i32, i32, i32, i32
  }
  func.func @transform_4(%arg0: i32, %arg1: i32) -> (i32, i32, i32, i32) {
    %c0_i32 = arith.constant 0 : i32
    %c0_i32_0 = arith.constant 0 : i32
    %c0_i32_1 = arith.constant 0 : i32
    return %arg0, %arg1, %c0_i32, %c0_i32_0 : i32, i32, i32, i32
  }
  func.func @transform_5(%arg0: i32, %arg1: i32) -> (i32, i32, i32, i32) {
    %c0_i32 = arith.constant 0 : i32
    %c0_i32_0 = arith.constant 0 : i32
    %c0_i32_1 = arith.constant 0 : i32
    return %arg0, %arg1, %c0_i32, %c0_i32_0 : i32, i32, i32, i32
  }
  func.func @transform_6(%arg0: i32, %arg1: i32) -> (i32, i32, i32, i32) {
    %c0_i32 = arith.constant 0 : i32
    %c0_i32_0 = arith.constant 0 : i32
    %c0_i32_1 = arith.constant 0 : i32
    return %arg0, %arg1, %c0_i32, %c0_i32_0 : i32, i32, i32, i32
  }
  func.func @transform_7(%arg0: i32, %arg1: i32) -> (i32, i32, i32, i32) {
    %c0_i32 = arith.constant 0 : i32
    %c0_i32_0 = arith.constant 0 : i32
    %c0_i32_1 = arith.constant 0 : i32
    return %arg0, %arg1, %c0_i32, %c0_i32_0 : i32, i32, i32, i32
  }
}

module attributes {stable_mosaic.version = 11 : i64} {
  func.func @_soft_token_ce_kernel(%arg0: i32, %arg1: memref<1x8x32xf32, #tpu.memory_space<vmem>>, %arg2: memref<1x8x32xf32, #tpu.memory_space<vmem>>, %arg3: memref<1x8x1xf32, #tpu.memory_space<vmem>>, %arg4: memref<1x8x1xf32, #tpu.memory_space<vmem>>) attributes {dimension_semantics = [#tpu.dimension_semantics<parallel>], iteration_bounds = array<i64: 2>, scalar_prefetch = 0 : i64, scratch_operands = 0 : i64, tpu.core_type = #tpu.core_type<tc>, window_params = [{transform_indices = @transform_0, window_bounds = array<i64: 1, 8, 32>}, {transform_indices = @transform_1, window_bounds = array<i64: 1, 8, 32>}, {transform_indices = @transform_2, window_bounds = array<i64: 1, 8, 1>}, {transform_indices = @transform_3, window_bounds = array<i64: 1, 8, 1>}]} {
    %c0 = arith.constant 0 : index
    %c0_0 = arith.constant 0 : index
    %c0_1 = arith.constant 0 : index
    %0 = vector.load %arg1[%c0, %c0_0, %c0_1] : memref<1x8x32xf32, #tpu.memory_space<vmem>>, vector<1x8x32xf32>
    %1 = vector.shape_cast %0 : vector<1x8x32xf32> to vector<8x32xf32>
    %cst = arith.constant dense<0xFF800000> : vector<8xf32>
    %2 = vector.multi_reduction <maximumf>, %1, %cst [1] : vector<8x32xf32> to vector<8xf32>
    %3 = vector.shape_cast %2 : vector<8xf32> to vector<8x1xf32>
    %4 = vector.broadcast %3 : vector<8x1xf32> to vector<8x32xf32>
    %5 = arith.subf %1, %4 : vector<8x32xf32>
    %6 = math.exp %5 : vector<8x32xf32>
    %cst_2 = arith.constant dense<0.000000e+00> : vector<8xf32>
    %7 = vector.multi_reduction <add>, %6, %cst_2 [1] : vector<8x32xf32> to vector<8xf32>
    %8 = vector.shape_cast %7 : vector<8xf32> to vector<8x1xf32>
    %9 = math.log %8 : vector<8x1xf32>
    %10 = arith.addf %3, %9 : vector<8x1xf32>
    %11 = vector.broadcast %10 : vector<8x1xf32> to vector<8x32xf32>
    %12 = arith.subf %1, %11 : vector<8x32xf32>
    %cst_3 = arith.constant 0.000000e+00 : f32
    %13 = vector.broadcast %cst_3 : f32 to vector<8x32xf32>
    %14 = arith.subf %13, %12 : vector<8x32xf32>
    %c0_4 = arith.constant 0 : index
    %c0_5 = arith.constant 0 : index
    %c0_6 = arith.constant 0 : index
    %15 = vector.load %arg2[%c0_4, %c0_5, %c0_6] : memref<1x8x32xf32, #tpu.memory_space<vmem>>, vector<1x8x32xf32>
    %16 = vector.shape_cast %15 : vector<1x8x32xf32> to vector<8x32xf32>
    %17 = arith.mulf %14, %16 : vector<8x32xf32>
    %cst_7 = arith.constant dense<0.000000e+00> : vector<8xf32>
    %18 = vector.multi_reduction <add>, %17, %cst_7 [1] : vector<8x32xf32> to vector<8xf32>
    %19 = vector.shape_cast %18 : vector<8xf32> to vector<8x1xf32>
    %c0_8 = arith.constant 0 : index
    %c0_9 = arith.constant 0 : index
    %c0_10 = arith.constant 0 : index
    %20 = vector.load %arg3[%c0_8, %c0_9, %c0_10] : memref<1x8x1xf32, #tpu.memory_space<vmem>>, vector<1x8x1xf32>
    %21 = vector.shape_cast %20 : vector<1x8x1xf32> to vector<8x1xf32>
    %22 = arith.mulf %19, %21 : vector<8x1xf32>
    %c0_11 = arith.constant 0 : index
    %c0_12 = arith.constant 0 : index
    %c0_13 = arith.constant 0 : index
    %23 = vector.load %arg4[%c0_11, %c0_12, %c0_13] : memref<1x8x1xf32, #tpu.memory_space<vmem>>, vector<1x8x1xf32>
    %24 = vector.shape_cast %23 : vector<1x8x1xf32> to vector<8x1xf32>
    %25 = vector.shape_cast %22 : vector<8x1xf32> to vector<1x8x1xf32>
    tpu.vector_store %arg4[%c0_11, %c0_12, %c0_13], %25 {strides = array<i32>} : memref<1x8x1xf32, #tpu.memory_space<vmem>>, vector<1x8x1xf32>,
    return
  }
  func.func @transform_0(%arg0: i32) -> (i32, i32, i32) {
    %c0_i32 = arith.constant 0 : i32
    %c0_i32_0 = arith.constant 0 : i32
    %c0_i32_1 = arith.constant 0 : i32
    return %arg0, %c0_i32, %c0_i32_0 : i32, i32, i32
  }
  func.func @transform_1(%arg0: i32) -> (i32, i32, i32) {
    %c0_i32 = arith.constant 0 : i32
    %c0_i32_0 = arith.constant 0 : i32
    %c0_i32_1 = arith.constant 0 : i32
    return %arg0, %c0_i32, %c0_i32_0 : i32, i32, i32
  }
  func.func @transform_2(%arg0: i32) -> (i32, i32, i32) {
    %c0_i32 = arith.constant 0 : i32
    %c0_i32_0 = arith.constant 0 : i32
    %c0_i32_1 = arith.constant 0 : i32
    return %arg0, %c0_i32, %c0_i32_0 : i32, i32, i32
  }
  func.func @transform_3(%arg0: i32) -> (i32, i32, i32) {
    %c0_i32 = arith.constant 0 : i32
    %c0_i32_0 = arith.constant 0 : i32
    %c0_i32_1 = arith.constant 0 : i32
    return %arg0, %c0_i32, %c0_i32_0 : i32, i32, i32
  }
}

</mosaic_0001>

<llo_original>
// kernel: custom-call.12
$region0: #{custom-call.12}
  %s0 = inlined_call_operand.vmem [shape: bf16[4,2,8,32], index: 0, kind: output, shape index: {}]

// kernel: _device_losses.2
$region0: #{_device_losses.2}
  #allocation0 [shape = 'u32[]', space=smem, size = 0x4, offset = 0x4, fixed_abs, tag = 'smem constant byte address 0x4 - core index']
  #allocation1 [shape = 'u32[144,128]{1,0:T(1,128)}', space=vmem, size = 0x12000, scoped, tag = 'internal scratch']
  %s0 = inlined_call_operand.vmem [shape: f32[2,8,32], index: 0, kind: input, shape index: {}]
  %s1 = inlined_call_operand.vmem [shape: f32[2,8,32], index: 1, kind: input, shape index: {}]
  %s2 = inlined_call_operand.vmem [shape: f32[2,8,1], index: 2, kind: input, shape index: {}]
  %s3 = inlined_call_operand.vmem [shape: f32[2,8,1], index: 3, kind: output, shape index: {}]
  %s4 = sld [smem:[#allocation0]]
  $region45: #{_device_losses.2} parent=0
    _
  %s6 = ssub.s32 1, %s4
  %s7 = scalar_select 0, %s6, %s4
  loop: start=0, step=1, limit=4
  $region2: #{_device_losses.2} parent=0 // loop_pre_header
    _
  $region3: #{_device_losses.2} parent=0 // loop_header
    %s9 = sphi 0, %s13
    %p10 = scmp.ge.s32.totalorder %s9, 4
    %s19 = sphi 0, %s21
    %s22 = sphi 0, %s19
    %s23 = sphi 0, %s22
    %s39 = sphi 0, %s23
    %s45 = sphi 0, %s47
    %s48 = sphi 0, %s45
    %s49 = sphi 0, %s48
    %s65 = sphi 0, %s49
    %s71 = sphi 0, %s73
    %s74 = sphi 0, %s71
    %s75 = sphi 0, %s74
    %s91 = sphi 0, %s75
    %s97 = sphi 0, %s99
    %s100 = sphi 0, %s97
    %s101 = sphi 0, %s100
    %s117 = sphi 0, %s101
  $region4: #{_device_losses.2} parent=0 // loop_header_branch
    %12 = sbr.rel (%p10) target = $region8
  $region5: #{_device_losses.2} parent=0 // loop_body
    %s14 = ssub.s32 %s9, 1
    %s15 = ssub.s32 %s9, 2
    %s16 = sadd.s32 %s9, 1
    %s17 = ssub.s32 %s9, %s16
    %p18 = scmp.eq.s32.totalorder %s17, 0
    %s20 = sadd.s32 %s19, 1
    %s21 = scalar_select %p18, %s19, %s20
    %p24 = pneg %p18
    %p25 = scmp.eq.s32.totalorder %s9, 1
    %p26 = por %p24, %p25
    %p27 = scmp.ne.s32.totalorder %s19, %s22
    %p28 = scmp.eq.s32.totalorder %s9, 0
    %p29 = por %p27, %p28
    %p30 = scmp.ne.s32.totalorder %s19, %s22
    %p31 = scmp.eq.s32.totalorder %s14, 1
    %p32 = por %p30, %p31
    %p33 = scmp.ne.s32.totalorder %s22, %s23
    %p34 = scmp.eq.s32.totalorder %s14, 0
    %p35 = por %p33, %p34
    %p36 = scmp.ne.s32.totalorder %s22, %s23
    %p37 = scmp.eq.s32.totalorder %s15, 1
    %p38 = por %p36, %p37
    %p40 = scmp.ne.s32.totalorder %s23, %s39
    %p41 = scmp.eq.s32.totalorder %s15, 0
    %p42 = por %p40, %p41
    %s43 = ssub.s32 %s9, %s16
    %p44 = scmp.eq.s32.totalorder %s43, 0
    %s46 = sadd.s32 %s45, 1
    %s47 = scalar_select %p44, %s45, %s46
    %p50 = pneg %p44
    %p51 = scmp.eq.s32.totalorder %s9, 1
    %p52 = por %p50, %p51
    %p53 = scmp.ne.s32.totalorder %s45, %s48
    %p54 = scmp.eq.s32.totalorder %s9, 0
    %p55 = por %p53, %p54
    %p56 = scmp.ne.s32.totalorder %s45, %s48
    %p57 = scmp.eq.s32.totalorder %s14, 1
    %p58 = por %p56, %p57
    %p59 = scmp.ne.s32.totalorder %s48, %s49
    %p60 = scmp.eq.s32.totalorder %s14, 0
    %p61 = por %p59, %p60
    %p62 = scmp.ne.s32.totalorder %s48, %s49
    %p63 = scmp.eq.s32.totalorder %s15, 1
    %p64 = por %p62, %p63
    %p66 = scmp.ne.s32.totalorder %s49, %s65
    %p67 = scmp.eq.s32.totalorder %s15, 0
    %p68 = por %p66, %p67
    %s69 = ssub.s32 %s9, %s16
    %p70 = scmp.eq.s32.totalorder %s69, 0
    %s72 = sadd.s32 %s71, 1
    %s73 = scalar_select %p70, %s71, %s72
    %p76 = pneg %p70
    %p77 = scmp.eq.s32.totalorder %s9, 1
    %p78 = por %p76, %p77
    %p79 = scmp.ne.s32.totalorder %s71, %s74
    %p80 = scmp.eq.s32.totalorder %s9, 0
    %p81 = por %p79, %p80
    %p82 = scmp.ne.s32.totalorder %s71, %s74
    %p83 = scmp.eq.s32.totalorder %s14, 1
    %p84 = por %p82, %p83
    %p85 = scmp.ne.s32.totalorder %s74, %s75
    %p86 = scmp.eq.s32.totalorder %s14, 0
    %p87 = por %p85, %p86
    %p88 = scmp.ne.s32.totalorder %s74, %s75
    %p89 = scmp.eq.s32.totalorder %s15, 1
    %p90 = por %p88, %p89
    %p92 = scmp.ne.s32.totalorder %s75, %s91
    %p93 = scmp.eq.s32.totalorder %s15, 0
    %p94 = por %p92, %p93
    %s95 = ssub.s32 %s9, %s16
    %p96 = scmp.eq.s32.totalorder %s95, 0
    %s98 = sadd.s32 %s97, 1
    %s99 = scalar_select %p96, %s97, %s98
    %p102 = pneg %p96
    %p103 = scmp.eq.s32.totalorder %s9, 1
    %p104 = por %p102, %p103
    %p105 = scmp.ne.s32.totalorder %s97, %s100
    %p106 = scmp.eq.s32.totalorder %s9, 0
    %p107 = por %p105, %p106
    %p108 = scmp.ne.s32.totalorder %s97, %s100
    %p109 = scmp.eq.s32.totalorder %s14, 1
    %p110 = por %p108, %p109
    %p111 = scmp.ne.s32.totalorder %s100, %s101
    %p112 = scmp.eq.s32.totalorder %s14, 0
    %p113 = por %p111, %p112
    %p114 = scmp.ne.s32.totalorder %s100, %s101
    %p115 = scmp.eq.s32.totalorder %s15, 1
    %p116 = por %p114, %p115
    %p118 = scmp.ne.s32.totalorder %s101, %s117
    %p119 = scmp.eq.s32.totalorder %s15, 0
    %p120 = por %p118, %p119
    %p121 = scmp.le.s32.totalorder 1, %s9
    %p122 = scmp.lt.s32.totalorder %s9, 3
    %p123 = pnand %p121, %p122
    %p124 = pneg %p123
    // Predicated region
    $region9: #{_device_losses.2} parent=5 // pred_check
      _
    $region10: #{_device_losses.2} parent=5 // pred_check_branch
      %126 = sbr.rel (%p123) target = $region12
    $region11: #{_device_losses.2} parent=5 // pred_region
      %s127 = ssub.s32 %s9, 1
    $region12: #{_device_losses.2} parent=5 // pred_fallthru
      _
    %p128 = scmp.lt.s32.totalorder %s9, 2
    // Predicated region
    $region13: #{_device_losses.2} parent=5 // pred_check
      %p129 = pneg %p128
    $region14: #{_device_losses.2} parent=5 // pred_check_branch
      %131 = sbr.rel (%p129) target = $region16
    $region15: #{_device_losses.2} parent=5 // pred_region
      // Predicated region
      $region17: #{_device_losses.2} parent=15 // pred_check
        %p132 = pneg %p29
      $region18: #{_device_losses.2} parent=15 // pred_check_branch
        %134 = sbr.rel (%p132) target = $region20
      $region19: #{_device_losses.2} parent=15 // pred_region
        %p135 = scmp.lt.s32.totalorder %s9, 1
        %s136 = scalar_select %p135, %s9, 1
        %s137 = smul.addr %s136, 8
        %s138 = scalar_lea.vmem %s0, %s137
      $region20: #{_device_losses.2} parent=15 // pred_fallthru
        _
      // Predicated region
      $region21: #{_device_losses.2} parent=15 // pred_check
        %p139 = pneg %p55
      $region22: #{_device_losses.2} parent=15 // pred_check_branch
        %141 = sbr.rel (%p139) target = $region24
      $region23: #{_device_losses.2} parent=15 // pred_region
        %p142 = scmp.lt.s32.totalorder %s9, 1
        %s143 = scalar_select %p142, %s9, 1
        %s144 = smul.addr %s143, 8
        %s145 = scalar_lea.vmem %s1, %s144
      $region24: #{_device_losses.2} parent=15 // pred_fallthru
        _
      // Predicated region
      $region25: #{_device_losses.2} parent=15 // pred_check
        %p146 = pneg %p81
      $region26: #{_device_losses.2} parent=15 // pred_check_branch
        %148 = sbr.rel (%p146) target = $region28
      $region27: #{_device_losses.2} parent=15 // pred_region
        %p149 = scmp.lt.s32.totalorder %s9, 1
        %s150 = scalar_select %p149, %s9, 1
        %s151 = smul.addr %s150, 8
        %s152 = scalar_lea.vmem %s2, %s151
      $region28: #{_device_losses.2} parent=15 // pred_fallthru
        _
    $region16: #{_device_losses.2} parent=5 // pred_fallthru
      _
    %p153 = scmp.le.s32.totalorder 1, %s9
    %p154 = scmp.lt.s32.totalorder %s9, 3
    %p155 = pnand %p153, %p154
    %p156 = pneg %p155
    // Predicated region
    $region29: #{_device_losses.2} parent=5 // pred_check
      _
    $region30: #{_device_losses.2} parent=5 // pred_check_branch
      %158 = sbr.rel (%p155) target = $region32
    $region31: #{_device_losses.2} parent=5 // pred_region
      %s159 = ssub.s32 %s9, 1
      %p160 = scmp.lt.s32.totalorder %s14, 1
      %s161 = scalar_select %p160, %s14, 1
      %s162 = smul.addr %s161, 8
      %s163 = scalar_lea.vmem %s0, %s162
      %p164 = pneg %p35
      %p165 = pneg %p32
      %p166 = scmp.lt.s32.totalorder %s14, 1
      %s167 = scalar_select %p166, %s14, 1
      %s168 = smul.addr %s167, 8
      %s169 = scalar_lea.vmem %s1, %s168
      %p170 = pneg %p61
      %p171 = pneg %p58
      %p172 = scmp.lt.s32.totalorder %s14, 1
      %s173 = scalar_select %p172, %s14, 1
      %s174 = smul.addr %s173, 8
      %s175 = scalar_lea.vmem %s2, %s174
      %p176 = pneg %p87
      %p177 = pneg %p84
      %p178 = pneg %p113
      %p179 = pneg %p110
      %p180 = scmp.lt.s32.totalorder %s14, 1
      %s181 = scalar_select %p180, %s14, 1
      %s182 = smul.addr %s181, 8
      %s183 = scalar_lea.vmem %s3, %s182
      %p184 = scmp.lt.s32.totalorder %s14, 1
      %s185 = scalar_select %p184, %s14, 1
      %s186 = smul.addr %s185, 8
      %s187 = scalar_lea.vmem %s0, %s186
      %p188 = scmp.lt.s32.totalorder %s14, 1
      %s189 = scalar_select %p188, %s14, 1
      %s190 = smul.addr %s189, 8
      %s191 = scalar_lea.vmem %s1, %s190
      %p192 = scmp.lt.s32.totalorder %s14, 1
      %s193 = scalar_select %p192, %s14, 1
      %s194 = smul.addr %s193, 8
      %s195 = scalar_lea.vmem %s2, %s194
      %p196 = scmp.lt.s32.totalorder %s14, 1
      %s197 = scalar_select %p196, %s14, 1
      %s198 = smul.addr %s197, 8
      %s199 = scalar_lea.vmem %s3, %s198
      %v200 = vld [vmem:[%s187] sm:$0xff]
      %vm201 = vcmask 261120
      %v202 = vsel %vm201, %v200, -inf
      %203 = vmax.xlane.f32.xlu0 %v202
      %v204 = vpop.xlane.xlu0 %203
      %v205 = vsub.f32 %v200, %v204
      %v206 = vmul.f32 %v205, 1.442695
      %v207 = vpow.pop %v206
      %v208 = vsel %vm201, %v207, 0.0
      %209 = vadd.xlane.f32.xlu0 %v208
      %v210 = vpop.xlane.xlu0 %209
      %v211 = vlog2.pop %v210
      %v212 = vmul.f32 %v211, 0.6931472
      %v213 = vadd.f32 %v204, %v212
      %v214 = vsub.f32 %v200, %v213
      %v215 = vsub.f32 0.0, %v214
      %v216 = vld [vmem:[%s191] sm:$0xff]
      %v217 = vmul.f32 %v215, %v216
      %v218 = vsel %vm201, %v217, 0.0
      %219 = vadd.xlane.f32.xlu0 %v218
      %v220 = vpop.xlane.xlu0 %219
      %v221 = vld [vmem:[%s195] sm:$0xff]
      %v222 = vmul.f32 %v220, %v221
      %vm223 = vcmask 7168
      %224 = vst.msk [vmem:[%s199] sm:$0xff] %vm223, %v222
      %p225 = scmp.lt.s32.totalorder %s14, 1
      %s226 = scalar_select %p225, %s14, 1
      %s227 = smul.addr %s226, 8
      %s228 = scalar_lea.vmem %s3, %s227
      // Predicated region
      $region33: #{_device_losses.2} parent=31 // pred_check
        %p229 = pneg %p110
      $region34: #{_device_losses.2} parent=31 // pred_check_branch
        %231 = sbr.rel (%p229) target = $region36
      $region35: #{_device_losses.2} parent=31 // pred_region
        _
      $region36: #{_device_losses.2} parent=31 // pred_fallthru
        _
    $region32: #{_device_losses.2} parent=5 // pred_fallthru
      _
    %p232 = scmp.le.s32.totalorder 2, %s9
    // Predicated region
    $region37: #{_device_losses.2} parent=5 // pred_check
      %p233 = pneg %p232
    $region38: #{_device_losses.2} parent=5 // pred_check_branch
      %235 = sbr.rel (%p233) target = $region40
    $region39: #{_device_losses.2} parent=5 // pred_region
      %s236 = ssub.s32 %s9, 2
      // Predicated region
      $region41: #{_device_losses.2} parent=39 // pred_check
        %p237 = pneg %p116
      $region42: #{_device_losses.2} parent=39 // pred_check_branch
        %239 = sbr.rel (%p237) target = $region44
      $region43: #{_device_losses.2} parent=39 // pred_region
        %p240 = scmp.lt.s32.totalorder %s15, 1
        %s241 = scalar_select %p240, %s15, 1
        %s242 = smul.addr %s241, 8
        %s243 = scalar_lea.vmem %s3, %s242
      $region44: #{_device_losses.2} parent=39 // pred_fallthru
        _
    $region40: #{_device_losses.2} parent=5 // pred_fallthru
      _
  $region6: #{_device_losses.2} parent=0 // loop_footer
    %s13 = sadd.s32 1, %s9
  $region7: #{_device_losses.2} parent=0 // loop_footer_branch
    %8 = sbr.rel target = $region3
  $region8: #{_device_losses.2} parent=0 // loop_exit
    _

// kernel: _device_losses.3
$region0: #{_device_losses.3}
  #allocation0 [shape = 'u32[]', space=smem, size = 0x4, offset = 0x4, fixed_abs, tag = 'smem constant byte address 0x4 - core index']
  #allocation1 [shape = 'u32[144,128]{1,0:T(1,128)}', space=vmem, size = 0x12000, scoped, tag = 'internal scratch']
  #allocation2 [shape = 'f32[1,1]{1,0:T(1,128)S(6)}', space=smem, size = 0x200, scoped, tag = 'scoped memory for _device_losses.3']
  %s0 = inlined_call_operand.<no memory space> [shape: f32[1,1], index: 0, kind: input, shape index: {}]
  %s1 = inlined_call_operand.vmem [shape: bf16[5,2,8,32], index: 1, kind: input, shape index: {}]
  %s2 = inlined_call_operand.vmem [shape: bf16[2,2,32,16], index: 2, kind: input, shape index: {}]
  %s3 = inlined_call_operand.vmem [shape: bf16[5,2,8,16], index: 3, kind: input, shape index: {}]
  %s4 = inlined_call_operand.vmem [shape: f32[5,2,8,1], index: 4, kind: input, shape index: {}]
  %s5 = inlined_call_operand.vmem [shape: f32[5,2,1,16], index: 5, kind: input, shape index: {}]
  %s6 = inlined_call_operand.vmem [shape: f32[5,2,8,1], index: 6, kind: output, shape index: {0}]
  %s7 = inlined_call_operand.vmem [shape: f32[5,2,1,16], index: 7, kind: output, shape index: {1}]
  %8 = xla_tuple %s6, %s7
  %s9 = sld [smem:[#allocation0]]
  $region65: #{_device_losses.3} parent=0
    _
  %s11 = ssub.s32 1, %s9
  %s12 = scalar_select 0, %s11, %s9
  %13 = sst [smem:[#allocation2]] %s0
  loop: start=0, step=1, limit=12
  $region2: #{_device_losses.3} parent=0 // loop_pre_header
    _
  $region3: #{_device_losses.3} parent=0 // loop_header
    %s15 = sphi 0, %s19
    %p16 = scmp.ge.s32.totalorder %s15, 12
    %s22 = sphi 0, %s34
    %s23 = sphi 0, %s30
    %s24 = sphi 0, %s22
    %s25 = sphi 0, %s23
    %s26 = sphi 0, %s24
    %s27 = sphi 0, %s25
    %s35 = sphi 0, %s35
    %s37 = sphi 0, %s35
    %s38 = sphi 0, %s37
    %s52 = sphi 0, %s38
    %s60 = sphi 0, %s62
    %s63 = sphi 0, %s60
    %s64 = sphi 0, %s63
    %s80 = sphi 0, %s64
    %s92 = sphi 0, %s94
    %s95 = sphi 0, %s92
    %s96 = sphi 0, %s95
    %s112 = sphi 0, %s96
    %s120 = sphi 0, %s122
    %s123 = sphi 0, %s120
    %s124 = sphi 0, %s123
    %s140 = sphi 0, %s124
    %s148 = sphi 0, %s150
    %s151 = sphi 0, %s148
    %s152 = sphi 0, %s151
    %s168 = sphi 0, %s152
    %s176 = sphi 0, %s178
    %s179 = sphi 0, %s176
    %s180 = sphi 0, %s179
    %s196 = sphi 0, %s180
    %s204 = sphi 0, %s206
    %s207 = sphi 0, %s204
    %s208 = sphi 0, %s207
    %s224 = sphi 0, %s208
    %s232 = sphi 0, %s234
    %s235 = sphi 0, %s232
    %s236 = sphi 0, %s235
    %s252 = sphi 0, %s236
  $region4: #{_device_losses.3} parent=0 // loop_header_branch
    %18 = sbr.rel (%p16) target = $region8
  $region5: #{_device_losses.3} parent=0 // loop_body
    %s20 = ssub.s32 %s15, 1
    %s21 = ssub.s32 %s15, 2
    %s28 = sadd.s32 1, %s23
    %p29 = scmp.ge.s32.totalorder %s28, 2
    %s30 = scalar_select %p29, 0, %s28
    %s31 = sadd.s32 1, %s22
    %s32 = scalar_select %p29, %s31, %s22
    %p33 = scmp.ge.s32.totalorder %s32, 5
    %s34 = scalar_select %p33, 0, %s32
    %s36 = sadd.s32 %s35, 1
    %p39 = scmp.eq.s32.totalorder %s15, 9
    %p40 = scmp.ne.s32.totalorder %s35, %s37
    %p41 = scmp.eq.s32.totalorder %s15, 0
    %p42 = por %p40, %p41
    %p43 = scmp.ne.s32.totalorder %s35, %s37
    %p44 = scmp.eq.s32.totalorder %s20, 9
    %p45 = por %p43, %p44
    %p46 = scmp.ne.s32.totalorder %s37, %s38
    %p47 = scmp.eq.s32.totalorder %s20, 0
    %p48 = por %p46, %p47
    %p49 = scmp.ne.s32.totalorder %s37, %s38
    %p50 = scmp.eq.s32.totalorder %s21, 9
    %p51 = por %p49, %p50
    %p53 = scmp.ne.s32.totalorder %s38, %s52
    %p54 = scmp.eq.s32.totalorder %s21, 0
    %p55 = por %p53, %p54
    %s56 = ssub.s32 %s22, %s34
    %s57 = ssub.s32 %s23, %s30
    %s58 = sor.u32 %s56, %s57
    %p59 = scmp.eq.s32.totalorder %s58, 0
    %s61 = sadd.s32 %s60, 1
    %s62 = scalar_select %p59, %s60, %s61
    %p65 = pneg %p59
    %p66 = scmp.eq.s32.totalorder %s15, 9
    %p67 = por %p65, %p66
    %p68 = scmp.ne.s32.totalorder %s60, %s63
    %p69 = scmp.eq.s32.totalorder %s15, 0
    %p70 = por %p68, %p69
    %p71 = scmp.ne.s32.totalorder %s60, %s63
    %p72 = scmp.eq.s32.totalorder %s20, 9
    %p73 = por %p71, %p72
    %p74 = scmp.ne.s32.totalorder %s63, %s64
    %p75 = scmp.eq.s32.totalorder %s20, 0
    %p76 = por %p74, %p75
    %p77 = scmp.ne.s32.totalorder %s63, %s64
    %p78 = scmp.eq.s32.totalorder %s21, 9
    %p79 = por %p77, %p78
    %p81 = scmp.ne.s32.totalorder %s64, %s80
    %p82 = scmp.eq.s32.totalorder %s21, 0
    %p83 = por %p81, %p82
    %p84 = scmp.lt.s32.totalorder %s22, 1
    %s85 = scalar_select %p84, %s22, 1
    %p86 = scmp.lt.s32.totalorder %s34, 1
    %s87 = scalar_select %p86, %s34, 1
    %s88 = ssub.s32 %s85, %s87
    %s89 = ssub.s32 %s23, %s30
    %s90 = sor.u32 %s88, %s89
    %p91 = scmp.eq.s32.totalorder %s90, 0
    %s93 = sadd.s32 %s92, 1
    %s94 = scalar_select %p91, %s92, %s93
    %p97 = pneg %p91
    %p98 = scmp.eq.s32.totalorder %s15, 9
    %p99 = por %p97, %p98
    %p100 = scmp.ne.s32.totalorder %s92, %s95
    %p101 = scmp.eq.s32.totalorder %s15, 0
    %p102 = por %p100, %p101
    %p103 = scmp.ne.s32.totalorder %s92, %s95
    %p104 = scmp.eq.s32.totalorder %s20, 9
    %p105 = por %p103, %p104
    %p106 = scmp.ne.s32.totalorder %s95, %s96
    %p107 = scmp.eq.s32.totalorder %s20, 0
    %p108 = por %p106, %p107
    %p109 = scmp.ne.s32.totalorder %s95, %s96
    %p110 = scmp.eq.s32.totalorder %s21, 9
    %p111 = por %p109, %p110
    %p113 = scmp.ne.s32.totalorder %s96, %s112
    %p114 = scmp.eq.s32.totalorder %s21, 0
    %p115 = por %p113, %p114
    %s116 = ssub.s32 %s22, %s34
    %s117 = ssub.s32 %s23, %s30
    %s118 = sor.u32 %s116, %s117
    %p119 = scmp.eq.s32.totalorder %s118, 0
    %s121 = sadd.s32 %s120, 1
    %s122 = scalar_select %p119, %s120, %s121
    %p125 = pneg %p119
    %p126 = scmp.eq.s32.totalorder %s15, 9
    %p127 = por %p125, %p126
    %p128 = scmp.ne.s32.totalorder %s120, %s123
    %p129 = scmp.eq.s32.totalorder %s15, 0
    %p130 = por %p128, %p129
    %p131 = scmp.ne.s32.totalorder %s120, %s123
    %p132 = scmp.eq.s32.totalorder %s20, 9
    %p133 = por %p131, %p132
    %p134 = scmp.ne.s32.totalorder %s123, %s124
    %p135 = scmp.eq.s32.totalorder %s20, 0
    %p136 = por %p134, %p135
    %p137 = scmp.ne.s32.totalorder %s123, %s124
    %p138 = scmp.eq.s32.totalorder %s21, 9
    %p139 = por %p137, %p138
    %p141 = scmp.ne.s32.totalorder %s124, %s140
    %p142 = scmp.eq.s32.totalorder %s21, 0
    %p143 = por %p141, %p142
    %s144 = ssub.s32 %s22, %s34
    %s145 = ssub.s32 %s23, %s30
    %s146 = sor.u32 %s144, %s145
    %p147 = scmp.eq.s32.totalorder %s146, 0
    %s149 = sadd.s32 %s148, 1
    %s150 = scalar_select %p147, %s148, %s149
    %p153 = pneg %p147
    %p154 = scmp.eq.s32.totalorder %s15, 9
    %p155 = por %p153, %p154
    %p156 = scmp.ne.s32.totalorder %s148, %s151
    %p157 = scmp.eq.s32.totalorder %s15, 0
    %p158 = por %p156, %p157
    %p159 = scmp.ne.s32.totalorder %s148, %s151
    %p160 = scmp.eq.s32.totalorder %s20, 9
    %p161 = por %p159, %p160
    %p162 = scmp.ne.s32.totalorder %s151, %s152
    %p163 = scmp.eq.s32.totalorder %s20, 0
    %p164 = por %p162, %p163
    %p165 = scmp.ne.s32.totalorder %s151, %s152
    %p166 = scmp.eq.s32.totalorder %s21, 9
    %p167 = por %p165, %p166
    %p169 = scmp.ne.s32.totalorder %s152, %s168
    %p170 = scmp.eq.s32.totalorder %s21, 0
    %p171 = por %p169, %p170
    %s172 = ssub.s32 %s22, %s34
    %s173 = ssub.s32 %s23, %s30
    %s174 = sor.u32 %s172, %s173
    %p175 = scmp.eq.s32.totalorder %s174, 0
    %s177 = sadd.s32 %s176, 1
    %s178 = scalar_select %p175, %s176, %s177
    %p181 = pneg %p175
    %p182 = scmp.eq.s32.totalorder %s15, 9
    %p183 = por %p181, %p182
    %p184 = scmp.ne.s32.totalorder %s176, %s179
    %p185 = scmp.eq.s32.totalorder %s15, 0
    %p186 = por %p184, %p185
    %p187 = scmp.ne.s32.totalorder %s176, %s179
    %p188 = scmp.eq.s32.totalorder %s20, 9
    %p189 = por %p187, %p188
    %p190 = scmp.ne.s32.totalorder %s179, %s180
    %p191 = scmp.eq.s32.totalorder %s20, 0
    %p192 = por %p190, %p191
    %p193 = scmp.ne.s32.totalorder %s179, %s180
    %p194 = scmp.eq.s32.totalorder %s21, 9
    %p195 = por %p193, %p194
    %p197 = scmp.ne.s32.totalorder %s180, %s196
    %p198 = scmp.eq.s32.totalorder %s21, 0
    %p199 = por %p197, %p198
    %s200 = ssub.s32 %s22, %s34
    %s201 = ssub.s32 %s23, %s30
    %s202 = sor.u32 %s200, %s201
    %p203 = scmp.eq.s32.totalorder %s202, 0
    %s205 = sadd.s32 %s204, 1
    %s206 = scalar_select %p203, %s204, %s205
    %p209 = pneg %p203
    %p210 = scmp.eq.s32.totalorder %s15, 9
    %p211 = por %p209, %p210
    %p212 = scmp.ne.s32.totalorder %s204, %s207
    %p213 = scmp.eq.s32.totalorder %s15, 0
    %p214 = por %p212, %p213
    %p215 = scmp.ne.s32.totalorder %s204, %s207
    %p216 = scmp.eq.s32.totalorder %s20, 9
    %p217 = por %p215, %p216
    %p218 = scmp.ne.s32.totalorder %s207, %s208
    %p219 = scmp.eq.s32.totalorder %s20, 0
    %p220 = por %p218, %p219
    %p221 = scmp.ne.s32.totalorder %s207, %s208
    %p222 = scmp.eq.s32.totalorder %s21, 9
    %p223 = por %p221, %p222
    %p225 = scmp.ne.s32.totalorder %s208, %s224
    %p226 = scmp.eq.s32.totalorder %s21, 0
    %p227 = por %p225, %p226
    %s228 = ssub.s32 %s22, %s34
    %s229 = ssub.s32 %s23, %s30
    %s230 = sor.u32 %s228, %s229
    %p231 = scmp.eq.s32.totalorder %s230, 0
    %s233 = sadd.s32 %s232, 1
    %s234 = scalar_select %p231, %s232, %s233
    %p237 = pneg %p231
    %p238 = scmp.eq.s32.totalorder %s15, 9
    %p239 = por %p237, %p238
    %p240 = scmp.ne.s32.totalorder %s232, %s235
    %p241 = scmp.eq.s32.totalorder %s15, 0
    %p242 = por %p240, %p241
    %p243 = scmp.ne.s32.totalorder %s232, %s235
    %p244 = scmp.eq.s32.totalorder %s20, 9
    %p245 = por %p243, %p244
    %p246 = scmp.ne.s32.totalorder %s235, %s236
    %p247 = scmp.eq.s32.totalorder %s20, 0
    %p248 = por %p246, %p247
    %p249 = scmp.ne.s32.totalorder %s235, %s236
    %p250 = scmp.eq.s32.totalorder %s21, 9
    %p251 = por %p249, %p250
    %p253 = scmp.ne.s32.totalorder %s236, %s252
    %p254 = scmp.eq.s32.totalorder %s21, 0
    %p255 = por %p253, %p254
    %p256 = scmp.le.s32.totalorder 1, %s15
    %p257 = scmp.lt.s32.totalorder %s15, 11
    %p258 = pnand %p256, %p257
    %p259 = pneg %p258
    // Predicated region
    $region9: #{_device_losses.3} parent=5 // pred_check
      _
    $region10: #{_device_losses.3} parent=5 // pred_check_branch
      %261 = sbr.rel (%p258) target = $region12
    $region11: #{_device_losses.3} parent=5 // pred_region
      %s262 = ssub.s32 %s15, 1
      // Predicated region
      $region13: #{_device_losses.3} parent=11 // pred_check
        %p263 = pneg %p48
      $region14: #{_device_losses.3} parent=11 // pred_check_branch
        %265 = sbr.rel (%p263) target = $region16
      $region15: #{_device_losses.3} parent=11 // pred_region
        _
      $region16: #{_device_losses.3} parent=11 // pred_fallthru
        _
    $region12: #{_device_losses.3} parent=5 // pred_fallthru
      _
    %p266 = scmp.lt.s32.totalorder %s15, 10
    // Predicated region
    $region17: #{_device_losses.3} parent=5 // pred_check
      %p267 = pneg %p266
    $region18: #{_device_losses.3} parent=5 // pred_check_branch
      %269 = sbr.rel (%p267) target = $region20
    $region19: #{_device_losses.3} parent=5 // pred_region
      // Predicated region
      $region21: #{_device_losses.3} parent=19 // pred_check
        %p270 = pneg %p70
      $region22: #{_device_losses.3} parent=19 // pred_check_branch
        %272 = sbr.rel (%p270) target = $region24
      $region23: #{_device_losses.3} parent=19 // pred_region
        %p273 = scmp.lt.s32.totalorder %s22, 4
        %s274 = scalar_select %p273, %s22, 4
        %p275 = scmp.lt.s32.totalorder %s23, 1
        %s276 = scalar_select %p275, %s23, 1
        %s277 = smul.addr %s274, 2
        %s278 = sadd.s32 %s276, %s277
        %s279 = smul.addr %s278, 4
        %s280 = scalar_lea.vmem %s1, %s279
      $region24: #{_device_losses.3} parent=19 // pred_fallthru
        _
      // Predicated region
      $region25: #{_device_losses.3} parent=19 // pred_check
        %p281 = pneg %p102
      $region26: #{_device_losses.3} parent=19 // pred_check_branch
        %283 = sbr.rel (%p281) target = $region28
      $region27: #{_device_losses.3} parent=19 // pred_region
        %p284 = scmp.lt.s32.totalorder %s22, 1
        %s285 = scalar_select %p284, %s22, 1
        %p286 = scmp.lt.s32.totalorder %s285, 1
        %s287 = scalar_select %p286, %s285, 1
        %p288 = scmp.lt.s32.totalorder %s23, 1
        %s289 = scalar_select %p288, %s23, 1
        %s290 = smul.addr %s289, 4
        %s291 = smul.addr %s287, 8
        %s292 = sadd.s32 %s290, %s291
        %s293 = smul.addr %s292, 4
        %s294 = scalar_lea.vmem %s2, %s293
        %p295 = scmp.lt.s32.totalorder %s22, 1
        %s296 = scalar_select %p295, %s22, 1
      $region28: #{_device_losses.3} parent=19 // pred_fallthru
        _
      // Predicated region
      $region29: #{_device_losses.3} parent=19 // pred_check
        %p297 = pneg %p130
      $region30: #{_device_losses.3} parent=19 // pred_check_branch
        %299 = sbr.rel (%p297) target = $region32
      $region31: #{_device_losses.3} parent=19 // pred_region
        %p300 = scmp.lt.s32.totalorder %s22, 4
        %s301 = scalar_select %p300, %s22, 4
        %p302 = scmp.lt.s32.totalorder %s23, 1
        %s303 = scalar_select %p302, %s23, 1
        %s304 = smul.addr %s301, 2
        %s305 = sadd.s32 %s303, %s304
        %s306 = smul.addr %s305, 4
        %s307 = scalar_lea.vmem %s3, %s306
      $region32: #{_device_losses.3} parent=19 // pred_fallthru
        _
      // Predicated region
      $region33: #{_device_losses.3} parent=19 // pred_check
        %p308 = pneg %p158
      $region34: #{_device_losses.3} parent=19 // pred_check_branch
        %310 = sbr.rel (%p308) target = $region36
      $region35: #{_device_losses.3} parent=19 // pred_region
        %p311 = scmp.lt.s32.totalorder %s22, 4
        %s312 = scalar_select %p311, %s22, 4
        %p313 = scmp.lt.s32.totalorder %s23, 1
        %s314 = scalar_select %p313, %s23, 1
        %s315 = smul.addr %s312, 2
        %s316 = sadd.s32 %s314, %s315
        %s317 = smul.addr %s316, 8
        %s318 = scalar_lea.vmem %s4, %s317
      $region36: #{_device_losses.3} parent=19 // pred_fallthru
        _
      // Predicated region
      $region37: #{_device_losses.3} parent=19 // pred_check
        %p319 = pneg %p186
      $region38: #{_device_losses.3} parent=19 // pred_check_branch
        %321 = sbr.rel (%p319) target = $region40
      $region39: #{_device_losses.3} parent=19 // pred_region
        %p322 = scmp.lt.s32.totalorder %s22, 4
        %s323 = scalar_select %p322, %s22, 4
        %p324 = scmp.lt.s32.totalorder %s23, 1
        %s325 = scalar_select %p324, %s23, 1
        %s326 = smul.addr %s323, 2
        %s327 = sadd.s32 %s325, %s326
        %s328 = scalar_lea.vmem %s5, %s327
      $region40: #{_device_losses.3} parent=19 // pred_fallthru
        _
    $region20: #{_device_losses.3} parent=5 // pred_fallthru
      _
    %p329 = scmp.le.s32.totalorder 1, %s15
    %p330 = scmp.lt.s32.totalorder %s15, 11
    %p331 = pnand %p329, %p330
    %p332 = pneg %p331
    // Predicated region
    $region41: #{_device_losses.3} parent=5 // pred_check
      _
    $region42: #{_device_losses.3} parent=5 // pred_check_branch
      %334 = sbr.rel (%p331) target = $region44
    $region43: #{_device_losses.3} parent=5 // pred_region
      %s335 = ssub.s32 %s15, 1
      %p336 = pneg %p48
      %p337 = pneg %p45
      %p338 = scmp.lt.s32.totalorder %s24, 4
      %s339 = scalar_select %p338, %s24, 4
      %p340 = scmp.lt.s32.totalorder %s25, 1
      %s341 = scalar_select %p340, %s25, 1
      %s342 = smul.addr %s339, 2
      %s343 = sadd.s32 %s341, %s342
      %s344 = smul.addr %s343, 4
      %s345 = scalar_lea.vmem %s1, %s344
      %p346 = pneg %p76
      %p347 = pneg %p73
      %p348 = scmp.lt.s32.totalorder %s24, 1
      %s349 = scalar_select %p348, %s24, 1
      %p350 = scmp.lt.s32.totalorder %s349, 1
      %s351 = scalar_select %p350, %s349, 1
      %p352 = scmp.lt.s32.totalorder %s25, 1
      %s353 = scalar_select %p352, %s25, 1
      %s354 = smul.addr %s353, 4
      %s355 = smul.addr %s351, 8
      %s356 = sadd.s32 %s354, %s355
      %s357 = smul.addr %s356, 4
      %s358 = scalar_lea.vmem %s2, %s357
      %p359 = pneg %p108
      %p360 = pneg %p105
      %p361 = scmp.lt.s32.totalorder %s24, 4
      %s362 = scalar_select %p361, %s24, 4
      %p363 = scmp.lt.s32.totalorder %s25, 1
      %s364 = scalar_select %p363, %s25, 1
      %s365 = smul.addr %s362, 2
      %s366 = sadd.s32 %s364, %s365
      %s367 = smul.addr %s366, 4
      %s368 = scalar_lea.vmem %s3, %s367
      %p369 = pneg %p136
      %p370 = pneg %p133
      %p371 = scmp.lt.s32.totalorder %s24, 4
      %s372 = scalar_select %p371, %s24, 4
      %p373 = scmp.lt.s32.totalorder %s25, 1
      %s374 = scalar_select %p373, %s25, 1
      %s375 = smul.addr %s372, 2
      %s376 = sadd.s32 %s374, %s375
      %s377 = smul.addr %s376, 8
      %s378 = scalar_lea.vmem %s4, %s377
      %p379 = pneg %p164
      %p380 = pneg %p161
      %p381 = scmp.lt.s32.totalorder %s24, 4
      %s382 = scalar_select %p381, %s24, 4
      %p383 = scmp.lt.s32.totalorder %s25, 1
      %s384 = scalar_select %p383, %s25, 1
      %s385 = smul.addr %s382, 2
      %s386 = sadd.s32 %s384, %s385
      %s387 = scalar_lea.vmem %s5, %s386
      %p388 = pneg %p192
      %p389 = pneg %p189
      %p390 = pneg %p220
      %p391 = pneg %p217
      %p392 = scmp.lt.s32.totalorder %s24, 4
      %s393 = scalar_select %p392, %s24, 4
      %p394 = scmp.lt.s32.totalorder %s25, 1
      %s395 = scalar_select %p394, %s25, 1
      %s396 = smul.addr %s393, 2
      %s397 = sadd.s32 %s395, %s396
      %s398 = smul.addr %s397, 8
      %s399 = scalar_lea.vmem %s6, %s398
      %p400 = pneg %p248
      %p401 = pneg %p245
      %p402 = scmp.lt.s32.totalorder %s24, 4
      %s403 = scalar_select %p402, %s24, 4
      %p404 = scmp.lt.s32.totalorder %s25, 1
      %s405 = scalar_select %p404, %s25, 1
      %s406 = smul.addr %s403, 2
      %s407 = sadd.s32 %s405, %s406
      %s408 = scalar_lea.vmem %s7, %s407
      %p409 = scmp.lt.s32.totalorder %s24, 4
      %s410 = scalar_select %p409, %s24, 4
      %p411 = scmp.lt.s32.totalorder %s25, 1
      %s412 = scalar_select %p411, %s25, 1
      %s413 = smul.addr %s410, 2
      %s414 = sadd.s32 %s412, %s413
      %s415 = smul.addr %s414, 4
      %s416 = scalar_lea.vmem %s1, %s415
      %p417 = scmp.lt.s32.totalorder %s24, 1
      %s418 = scalar_select %p417, %s24, 1
      %p419 = scmp.lt.s32.totalorder %s418, 1
      %s420 = scalar_select %p419, %s418, 1
      %p421 = scmp.lt.s32.totalorder %s25, 1
      %s422 = scalar_select %p421, %s25, 1
      %s423 = smul.addr %s422, 4
      %s424 = smul.addr %s420, 8
      %s425 = sadd.s32 %s423, %s424
      %s426 = smul.addr %s425, 4
      %s427 = scalar_lea.vmem %s2, %s426
      %p428 = scmp.lt.s32.totalorder %s24, 1
      %s429 = scalar_select %p428, %s24, 1
      %p430 = scmp.lt.s32.totalorder %s24, 4
      %s431 = scalar_select %p430, %s24, 4
      %p432 = scmp.lt.s32.totalorder %s25, 1
      %s433 = scalar_select %p432, %s25, 1
      %s434 = smul.addr %s431, 2
      %s435 = sadd.s32 %s433, %s434
      %s436 = smul.addr %s435, 4
      %s437 = scalar_lea.vmem %s3, %s436
      %p438 = scmp.lt.s32.totalorder %s24, 4
      %s439 = scalar_select %p438, %s24, 4
      %p440 = scmp.lt.s32.totalorder %s25, 1
      %s441 = scalar_select %p440, %s25, 1
      %s442 = smul.addr %s439, 2
      %s443 = sadd.s32 %s441, %s442
      %s444 = smul.addr %s443, 8
      %s445 = scalar_lea.vmem %s4, %s444
      %p446 = scmp.lt.s32.totalorder %s24, 4
      %s447 = scalar_select %p446, %s24, 4
      %p448 = scmp.lt.s32.totalorder %s25, 1
      %s449 = scalar_select %p448, %s25, 1
      %s450 = smul.addr %s447, 2
      %s451 = sadd.s32 %s449, %s450
      %s452 = scalar_lea.vmem %s5, %s451
      %p453 = scmp.lt.s32.totalorder %s24, 4
      %s454 = scalar_select %p453, %s24, 4
      %p455 = scmp.lt.s32.totalorder %s25, 1
      %s456 = scalar_select %p455, %s25, 1
      %s457 = smul.addr %s454, 2
      %s458 = sadd.s32 %s456, %s457
      %s459 = smul.addr %s458, 8
      %s460 = scalar_lea.vmem %s6, %s459
      %p461 = scmp.lt.s32.totalorder %s24, 4
      %s462 = scalar_select %p461, %s24, 4
      %p463 = scmp.lt.s32.totalorder %s25, 1
      %s464 = scalar_select %p463, %s25, 1
      %s465 = smul.addr %s462, 2
      %s466 = sadd.s32 %s464, %s465
      %s467 = scalar_lea.vmem %s7, %s466
      %s471 = sld [smem:[#allocation2]]
      %v472 = vld [vmem:[%s416] sm:$0xf]
      %v473 = vld [vmem:[%s427] sm:$0xf]
      %v474 = vld [vmem:[%s427 + $0x4] sm:$0xf]
      %v475 = vld [vmem:[%s427 + $0x8] sm:$0xf]
      %v476 = vld [vmem:[%s427 + $0xc] sm:$0xf]
      %v481 = vunpack.c.l.b16 %v473
      %v482 = vunpack.c.l.b16 %v474
      %v483 = vunpack.c.l.b16 %v475
      %v484 = vunpack.c.l.b16 %v476
      %v485 = vpack.c.b16 %v482, %v481
      %v486 = vpack.c.b16 %v484, %v483
      %vm489 = vcmask 261120
      %v491 = vsel %vm489, %v472, 0
      %493 = vmatprep.subr.bf16.mxu0 0
      %494 = vmatpush1.bf16.msra.mxu0 %v485
      %495 = vmatprep.subr.bf16.mxu0 0
      %496 = vmatpush1.bf16.msra.mxu0 %v486
      %497 = vmatprep.subr.bf16.mxu0 0
      %498 = vmatpush1.bf16.msra.mxu0 0
      %499 = vmatprep.subr.bf16.mxu0 0
      %500 = vmatpush1.bf16.msra.mxu0 0
      %501 = vmatprep.subr.bf16.mxu0 0
      %502 = vmatpush1.bf16.msra.mxu0 0
      %503 = vmatprep.subr.bf16.mxu0 0
      %504 = vmatpush1.bf16.msra.mxu0 0
      %505 = vmatprep.subr.bf16.mxu0 0
      %506 = vmatpush1.bf16.msra.mxu0 0
      %507 = vmatprep.subr.bf16.mxu0 0
      %508 = vmatpush1.bf16.msra.mxu0 0
      %509 = vmatprep.subr.bf16.mxu0 0
      %510 = vmatpush1.bf16.msra.mxu0 0
      %511 = vmatprep.subr.bf16.mxu0 0
      %512 = vmatpush1.bf16.msra.mxu0 0
      %513 = vmatprep.subr.bf16.mxu0 0
      %514 = vmatpush1.bf16.msra.mxu0 0
      %515 = vmatprep.subr.bf16.mxu0 0
      %516 = vmatpush1.bf16.msra.mxu0 0
      %517 = vmatprep.subr.bf16.mxu0 0
      %518 = vmatpush1.bf16.msra.mxu0 0
      %519 = vmatprep.subr.bf16.mxu0 0
      %520 = vmatpush1.bf16.msra.mxu0 0
      %521 = vmatprep.subr.bf16.mxu0 0
      %522 = vmatpush1.bf16.msra.mxu0 0
      %523 = vmatprep.subr.bf16.mxu0 0
      %524 = vmatpush1.bf16.msra.mxu0 0
      %525 = vmatprep.mubr.bf16.mxu0 0
      %526 = vmatmul.mubr.bf16.gmra.mrb[0].mxu0 %v491
      %v527 = vpop.f32.mrb[0].mxu0
      %v528 = vadd.f32 0.0, %v527
      %v529 = vpop.f32.mrb[0].mxu0
      %v530 = vpop.f32.mrb[0].mxu0
      %v531 = vpop.f32.mrb[0].mxu0
      %532 = vdwg.mxu0
      %v533 = vstv %s471
      %v534 = vmul.f32 %v528, %v533
      %v535 = vld [vmem:[%s437] sm:$0xf]
      %vm536 = vcmp.gt.bf16.partialorder %v535, 0
      %v537 = vsel %vm536, 65537, 0
      %v538 = vunpack.c.l.b16 %v537
      %vm539 = vcmp.ne.s32.totalorder %v538, 0
      %v540 = vsel %vm539, %v534, 0.0
      %vm541 = vcmask 130048
      %v542 = vsel %vm541, %v534, -inf
      %543 = vmax.xlane.f32.xlu0 %v542
      %v544 = vpop.xlane.xlu0 %543
      %v545 = vrot.slane %v544, 4
      %v546 = vmax.f32 %v544, %v545
      %v547 = vrot.slane %v546, 2
      %v548 = vmax.f32 %v546, %v547
      %v549 = vrot.slane %v548, 1
      %v550 = vmax.f32 %v548, %v549
      %v551 = vsub.f32 %v534, %v550
      %v552 = vmul.f32 %v551, 1.442695
      %v553 = vpow.pop %v552
      %v554 = vsel %vm539, 1, 0
      %v555 = vcvt.s32.f32 %v554
      %v556 = vsel %vm541, %v555, 0.0
      %557 = vadd.xlane.f32.xlu0 %v556
      %v558 = vpop.xlane.xlu0 %557
      %v559 = vsel %vm541, %v553, 0.0
      %560 = vadd.xlane.f32.xlu0 %v559
      %v561 = vpop.xlane.xlu0 %560
      %v562 = vlog2.pop %v561
      %v563 = vmul.f32 %v562, 0.6931472
      %v564 = vadd.f32 %v550, %v563
      %v565 = vsel %vm541, %v540, 0.0
      %566 = vadd.xlane.f32.xlu0 %v565
      %v567 = vpop.xlane.xlu0 %566
      %v568 = vsub.f32 0.0, %v567
      %v569 = vadd.f32 %v558, 1e-06
      %v570 = vrcp.pop %v569
      %v571 = vmul.f32 %v568, %v570
      %v572 = vadd.f32 %v571, %v564
      %vm573 = vcmp.gt.f32.partialorder %v558, 0.0
      %v574 = vsel %vm573, %v572, 0.0
      %v575 = vld [vmem:[%s445] sm:$0xff]
      %v576 = vmul.f32 %v574, %v575
      %vm577 = vcmask 7168
      %578 = vst.msk [vmem:[%s460] sm:$0xff] %vm577, %v576
      %v579 = vrot.slane %v556, 4
      %v580 = vadd.f32 %v556, %v579
      %v581 = vrot.slane %v580, 2
      %v582 = vadd.f32 %v580, %v581
      %v583 = vrot.slane %v582, 1
      %v584 = vadd.f32 %v582, %v583
      %v585 = vrot.slane %v559, 4
      %v586 = vadd.f32 %v559, %v585
      %v587 = vrot.slane %v586, 2
      %v588 = vadd.f32 %v586, %v587
      %v589 = vrot.slane %v588, 1
      %v590 = vadd.f32 %v588, %v589
      %v591 = vlog2.pop %v590
      %v592 = vmul.f32 %v591, 0.6931472
      %v593 = vadd.f32 %v550, %v592
      %v594 = vrot.slane %v565, 4
      %v595 = vadd.f32 %v565, %v594
      %v596 = vrot.slane %v595, 2
      %v597 = vadd.f32 %v595, %v596
      %v598 = vrot.slane %v597, 1
      %v599 = vadd.f32 %v597, %v598
      %v600 = vsub.f32 0.0, %v599
      %v601 = vadd.f32 %v584, 1e-06
      %v602 = vrcp.pop %v601
      %v603 = vmul.f32 %v600, %v602
      %v604 = vadd.f32 %v603, %v593
      %vm605 = vcmp.gt.f32.partialorder %v584, 0.0
      %v606 = vsel %vm605, %v604, 0.0
      %v607 = vld [vmem:[%s452] sm:$0x1]
      %v608 = vmul.f32 %v606, %v607
      %vm609 = vcmask 122880
      %610 = vst.msk [vmem:[%s467] sm:$0x1] %vm609, %v608
      %p611 = scmp.lt.s32.totalorder %s24, 4
      %s612 = scalar_select %p611, %s24, 4
      %p613 = scmp.lt.s32.totalorder %s25, 1
      %s614 = scalar_select %p613, %s25, 1
      %s615 = smul.addr %s612, 2
      %s616 = sadd.s32 %s614, %s615
      %s617 = smul.addr %s616, 8
      %s618 = scalar_lea.vmem %s6, %s617
      %p619 = scmp.lt.s32.totalorder %s24, 4
      %s620 = scalar_select %p619, %s24, 4
      %p621 = scmp.lt.s32.totalorder %s25, 1
      %s622 = scalar_select %p621, %s25, 1
      %s623 = smul.addr %s620, 2
      %s624 = sadd.s32 %s622, %s623
      %s625 = scalar_lea.vmem %s7, %s624
      // Predicated region
      $region45: #{_device_losses.3} parent=43 // pred_check
        %p626 = pneg %p217
      $region46: #{_device_losses.3} parent=43 // pred_check_branch
        %628 = sbr.rel (%p626) target = $region48
      $region47: #{_device_losses.3} parent=43 // pred_region
        _
      $region48: #{_device_losses.3} parent=43 // pred_fallthru
        _
      // Predicated region
      $region49: #{_device_losses.3} parent=43 // pred_check
        %p629 = pneg %p245
      $region50: #{_device_losses.3} parent=43 // pred_check_branch
        %631 = sbr.rel (%p629) target = $region52
      $region51: #{_device_losses.3} parent=43 // pred_region
        _
      $region52: #{_device_losses.3} parent=43 // pred_fallthru
        _
    $region44: #{_device_losses.3} parent=5 // pred_fallthru
      _
    %p632 = scmp.le.s32.totalorder 2, %s15
    // Predicated region
    $region53: #{_device_losses.3} parent=5 // pred_check
      %p633 = pneg %p632
    $region54: #{_device_losses.3} parent=5 // pred_check_branch
      %635 = sbr.rel (%p633) target = $region56
    $region55: #{_device_losses.3} parent=5 // pred_region
      %s636 = ssub.s32 %s15, 2
      // Predicated region
      $region57: #{_device_losses.3} parent=55 // pred_check
        %p637 = pneg %p223
      $region58: #{_device_losses.3} parent=55 // pred_check_branch
        %639 = sbr.rel (%p637) target = $region60
      $region59: #{_device_losses.3} parent=55 // pred_region
        %p640 = scmp.lt.s32.totalorder %s26, 4
        %s641 = scalar_select %p640, %s26, 4
        %p642 = scmp.lt.s32.totalorder %s27, 1
        %s643 = scalar_select %p642, %s27, 1
        %s644 = smul.addr %s641, 2
        %s645 = sadd.s32 %s643, %s644
        %s646 = smul.addr %s645, 8
        %s647 = scalar_lea.vmem %s6, %s646
      $region60: #{_device_losses.3} parent=55 // pred_fallthru
        _
      // Predicated region
      $region61: #{_device_losses.3} parent=55 // pred_check
        %p648 = pneg %p251
      $region62: #{_device_losses.3} parent=55 // pred_check_branch
        %650 = sbr.rel (%p648) target = $region64
      $region63: #{_device_losses.3} parent=55 // pred_region
        %p651 = scmp.lt.s32.totalorder %s26, 4
        %s652 = scalar_select %p651, %s26, 4
        %p653 = scmp.lt.s32.totalorder %s27, 1
        %s654 = scalar_select %p653, %s27, 1
        %s655 = smul.addr %s652, 2
        %s656 = sadd.s32 %s654, %s655
        %s657 = scalar_lea.vmem %s7, %s656
      $region64: #{_device_losses.3} parent=55 // pred_fallthru
        _
    $region56: #{_device_losses.3} parent=5 // pred_fallthru
      _
  $region6: #{_device_losses.3} parent=0 // loop_footer
    %s19 = sadd.s32 1, %s15
  $region7: #{_device_losses.3} parent=0 // loop_footer_branch
    %14 = sbr.rel target = $region3
  $region8: #{_device_losses.3} parent=0 // loop_exit
    _

</llo_original>
